<compile_context>
chip_gen: v7x
topology: tpu7x:2x2x1
jax: 0.10.0
libtpu: 0.0.40
codegen_flags: <defaults>
</compile_context>

<pallas_src>
from functools import partial

import jax
import jax.numpy as jnp
from jax.experimental import pallas as pl
from jax.experimental.pallas import tpu as pltpu


def _make_kernel(w_half: int):
    def kernel(slope_ref, m_ref, o_ref):
        # slope_ref: SMEM (1,)        f32 scalar (traced -> no recompile on change)
        # m_ref:     VMEM (1, w_half) f32 learnable logits (unpadded)
        # o_ref:     VMEM (1, w_pad)  f32 lane-dense output buffer
        #
        # One full-width unmasked store zeroes the whole lane-dense tile
        # (covers both the "second half of kspace" zeros and the lane padding).
        o_ref[...] = jnp.zeros_like(o_ref)
        # VPU mul -> EUP sigmoid on the (1, w_half) block, then a single tiny
        # masked store into the first w_half lanes.
        slope = slope_ref[0]
        o_ref[:, :w_half] = jax.nn.sigmoid(slope * m_ref[...])

    return kernel


@partial(jax.jit, static_argnames=("w",))
def half_line_prob_mask_lanes(mask_param: jax.Array,
                              slope: jax.Array,
                              *, w: int) -> jax.Array:
    """Lane-dense Pallas forward: returns a (1, w_pad) f32 buffer whose first
    w//2 lanes hold sigmoid(slope * mask_param) and whose remaining lanes are
    exactly 0.0.  w_pad is w rounded up to a multiple of 128 lanes."""
    w_half = w // 2
    assert mask_param.shape == (w_half,), (mask_param.shape, w_half)
    w_pad = max(128, ((w + 127) // 128) * 128)

    m2d = mask_param.astype(jnp.float32).reshape(1, w_half)
    slope_arr = jnp.asarray(slope, dtype=jnp.float32).reshape(1)

    return pl.pallas_call(
        _make_kernel(w_half),
        out_shape=jax.ShapeDtypeStruct((1, w_pad), jnp.float32),
        in_specs=[
            pl.BlockSpec(memory_space=pltpu.MemorySpace.SMEM),   # slope scalar
            pl.BlockSpec(memory_space=pltpu.MemorySpace.VMEM),   # raw logits
        ],
        out_specs=pl.BlockSpec(memory_space=pltpu.MemorySpace.VMEM),
        cost_estimate=pl.CostEstimate(
            flops=2 * w_half,
            transcendentals=w_half,
            bytes_accessed=4 * (1 + w_half + w_pad),
        ),
    )(slope_arr, m2d)


def half_line_constrained_prob_mask(x_nhwc: jax.Array,
                                    mask_param: jax.Array,
                                    slope: jax.Array) -> jax.Array:
    """Matches HalfLineConstrainedProbMask.forward: returns (1, 1, W, 1).

    Only W = x_nhwc.shape[2] is used (the PyTorch module never reads the
    input values).  Prefer half_line_prob_mask_lanes() for downstream Pallas
    consumers — it hands back the already lane-dense buffer.
    """
    w = int(x_nhwc.shape[2])
    lanes = half_line_prob_mask_lanes(mask_param, slope, w=w)
    # Layout plumbing only, to reproduce the PyTorch (1, 1, W, 1) convention.
    return lanes[:, :w].reshape(1, 1, w, 1)


def init_mask_param(key, w: int, slope: float = 5.0, eps: float = 0.01) -> jax.Array:
    """Deterministic replica of HalfLineConstrainedProbMask._slope_random_uniform."""
    temp = jax.random.uniform(key, (w // 2,), jnp.float32, minval=eps, maxval=1.0 - eps)
    return -jnp.log(1.0 / temp - 1.0) / slope


def reference_forward(x_nhwc, mask_param, slope):
    w = x_nhwc.shape[2]
    sig = jax.nn.sigmoid(slope * mask_param.astype(jnp.float32)).reshape(1, 1, w // 2, 1)
    zero_mask = jnp.zeros((1, 1, w, 1), jnp.float32)
    return zero_mask.at[:, :, : w // 2].set(sig)


if __name__ == "__main__":
    key = jax.random.PRNGKey(0)
    k_param, k_x = jax.random.split(key)

    N, H, W, C = 2, 4, 16, 16          # NHWC input; module shape=[W]
    slope = jnp.float32(5.0)           # traced scalar: annealing -> no recompile
    x = jax.random.normal(k_x, (N, H, W, C), jnp.float32)
    mask_param = init_mask_param(k_param, W, slope=5.0)

    # Lane-dense kernel output (what a fused consumer would take directly).
    lanes = jax.block_until_ready(half_line_prob_mask_lanes(mask_param, slope, w=W))
    assert lanes.shape == (1, 128), lanes.shape
    assert jnp.all(lanes[:, W // 2:] == 0.0), "padding / second half not zero"

    # PyTorch-shaped view, checked against a pure-JAX reference.
    out = jax.block_until_ready(half_line_constrained_prob_mask(x, mask_param, slope))
    ref = reference_forward(x, mask_param, slope)
    assert out.shape == (1, 1, W, 1), out.shape
    assert jnp.allclose(out, ref, atol=1e-6), "mismatch vs reference"

    # Slope annealing reuses the same compiled executable (slope is traced).
    out2 = jax.block_until_ready(
        half_line_constrained_prob_mask(x, mask_param, jnp.float32(7.5)))
    ref2 = reference_forward(x, mask_param, jnp.float32(7.5))
    assert jnp.allclose(out2, ref2, atol=1e-6), "mismatch vs reference (slope=7.5)"

    print("KERNEL_OK")
</pallas_src>

<mosaic_0001>
module attributes {stable_mosaic.version = 11 : i64} {
  func.func @kernel(%arg0: memref<1xf32, #tpu.memory_space<smem>>, %arg1: memref<1x8xf32, #tpu.memory_space<vmem>>, %arg2: memref<1x128xf32, #tpu.memory_space<vmem>>) attributes {dimension_semantics = [], scalar_prefetch = 0 : i64, scratch_operands = 0 : i64, tpu.core_type = #tpu.core_type<tc>} {
    %cst = arith.constant 0.000000e+00 : f32
    %0 = vector.broadcast %cst : f32 to vector<1x128xf32>
    %c0 = arith.constant 0 : index
    %c0_0 = arith.constant 0 : index
    %1 = vector.load %arg2[%c0, %c0_0] : memref<1x128xf32, #tpu.memory_space<vmem>>, vector<1x128xf32>
    tpu.vector_store %arg2[%c0, %c0_0], %0 {strides = array<i32>} : memref<1x128xf32, #tpu.memory_space<vmem>>, vector<1x128xf32>,
    %c0_1 = arith.constant 0 : index
    %2 = memref.load %arg0[%c0_1] : memref<1xf32, #tpu.memory_space<smem>>
    %c0_2 = arith.constant 0 : index
    %c0_3 = arith.constant 0 : index
    %3 = vector.load %arg1[%c0_2, %c0_3] : memref<1x8xf32, #tpu.memory_space<vmem>>, vector<1x8xf32>
    %4 = vector.broadcast %2 : f32 to vector<1x8xf32>
    %5 = arith.mulf %4, %3 : vector<1x8xf32>
    %6 = arith.negf %5 : vector<1x8xf32>
    %7 = math.exp %6 : vector<1x8xf32>
    %cst_4 = arith.constant 1.000000e+00 : f32
    %8 = vector.broadcast %cst_4 : f32 to vector<1x8xf32>
    %9 = arith.addf %8, %7 : vector<1x8xf32>
    %10 = arith.divf %8, %9 : vector<1x8xf32>
    %c0_5 = arith.constant 0 : index
    %c0_6 = arith.constant 0 : index
    %11 = vector.load %arg2[%c0_5, %c0_6] : memref<1x128xf32, #tpu.memory_space<vmem>>, vector<1x8xf32>
    tpu.vector_store %arg2[%c0_5, %c0_6], %10 {strides = array<i32>} : memref<1x128xf32, #tpu.memory_space<vmem>>, vector<1x8xf32>,
    return
  }
}

</mosaic_0001>

<llo_original>
// kernel: half_line_prob_mask_lanes.1
$region0: #{half_line_prob_mask_lanes.1}
  #allocation0 [shape = 'u32[]', space=smem, size = 0x4, offset = 0x4, fixed_abs, tag = 'smem constant byte address 0x4 - core index']
  #allocation1 [shape = 'u32[144,128]{1,0:T(1,128)}', space=vmem, size = 0x12000, scoped, tag = 'internal scratch']
  #allocation2 [shape = 'f32[1]{0:T(128)S(6)}', space=smem, size = 0x200, scoped, tag = 'scoped memory for half_line_prob_mask_lanes.1']
  %s0 = inlined_call_operand.<no memory space> [shape: f32[1], index: 0, kind: input, shape index: {}]
  %s1 = inlined_call_operand.vmem [shape: f32[1,8], index: 1, kind: input, shape index: {}]
  %s2 = inlined_call_operand.hbm [shape: f32[1,128], index: 2, kind: output, shape index: {}]
  %s3 = sld [smem:[#allocation0]]
  $region18: #{half_line_prob_mask_lanes.1} parent=0
    _
  %s5 = ssub.s32 1, %s3
  %s6 = scalar_select 0, %s5, %s3
  %7 = sst [smem:[#allocation2]] %s0
  $region1: #{half_line_prob_mask_lanes.1} parent=0
    #allocation3 [shape = 'u8[512]{0}', space=vmem, size = 0x400, scoped, tag = 'output window, operand 0, single buffered']
    #allocation4 [shape = 's32[1]{0}', space=sflag, size = 0x4, scoped, tag = 'scoped memory for half_line_prob_mask_lanes.1']
    %8 = vsyncpa [#allocation4], 0
    // Predicated region
    $region2: #{half_line_prob_mask_lanes.1} parent=1 // pred_check
      _
    $region3: #{half_line_prob_mask_lanes.1} parent=1 // pred_check_branch
      %10 = sbr.rel (0) target = $region5
    $region4: #{half_line_prob_mask_lanes.1} parent=1 // pred_region
      _
    $region5: #{half_line_prob_mask_lanes.1} parent=1 // pred_fallthru
      _
    // Predicated region
    $region6: #{half_line_prob_mask_lanes.1} parent=1 // pred_check
      _
    $region7: #{half_line_prob_mask_lanes.1} parent=1 // pred_check_branch
      %12 = sbr.rel (0) target = $region9
    $region8: #{half_line_prob_mask_lanes.1} parent=1 // pred_region
      _
    $region9: #{half_line_prob_mask_lanes.1} parent=1 // pred_fallthru
      _
    %13 = vst [vmem:[#allocation3] sm:$0x1] 0.0
    %s14 = sld [smem:[#allocation2]]
    %v15 = vld [vmem:[%s1] sm:$0x1]
    %v16 = vstv %s14
    %v17 = vmul.f32 %v16, %v15
    %v18 = vxor.u32 %v17, 2147483648
    %v19 = vmul.f32 %v18, 1.442695
    %v20 = vpow.pop %v19
    %v21 = vadd.f32 %v20, 1.0
    %v22 = vrcp.pop %v21
    %v23 = vmul.f32 1.0, %v22
    %vm24 = vcmask 57344
    %25 = vst.msk [vmem:[#allocation3] sm:$0x1] %vm24, %v23
    // Predicated region
    $region10: #{half_line_prob_mask_lanes.1} parent=1 // pred_check
      _
    $region11: #{half_line_prob_mask_lanes.1} parent=1 // pred_check_branch
      %27 = sbr.rel (0) target = $region13
    $region12: #{half_line_prob_mask_lanes.1} parent=1 // pred_region
      %s29 = ssub.s32 16, 16
      %30 = vsyncadd [#allocation4], %s29
      %s32 = sshll.u32 [#allocation3], 4
      %s33 = int_to_ptr.vmem [resolvable:$true] %s32
      %35 = dma.vmem_to_hbm [thread:$0]  %s33, 16, %s2, [#allocation4]
    $region13: #{half_line_prob_mask_lanes.1} parent=1 // pred_fallthru
      _
    // Predicated region
    $region14: #{half_line_prob_mask_lanes.1} parent=1 // pred_check
      _
    $region15: #{half_line_prob_mask_lanes.1} parent=1 // pred_check_branch
      %37 = sbr.rel (0) target = $region17
    $region16: #{half_line_prob_mask_lanes.1} parent=1 // pred_region
      %38 = dma.done [#allocation4], 16
    $region17: #{half_line_prob_mask_lanes.1} parent=1 // pred_fallthru
      _
    %39 = vsyncpa [#allocation4], 1

</llo_original>
